<compile_context>
chip_gen: v5e
topology: v5e:2x2
jax: 0.10.0
libtpu: 0.0.40
codegen_flags: <defaults>
</compile_context>

<pallas_src>
import functools
import math

import jax
import jax.numpy as jnp
from jax.experimental import pallas as pl
from jax.experimental.pallas import tpu as pltpu

_LANE_CANDIDATES = (4096, 2048, 1024, 512, 256, 128)

# Per-buffer block cap.  VMEM budget: (in + out) x 2 double-buffers x 8 MiB
# = 32 MiB, comfortably under the explicit 48 MiB scoped-VMEM limit below on
# every generation (v7x: 64 MiB physical; v5e/v6e: 128 MiB physical).
_MAX_BLOCK_BYTES = 8 * 1024 * 1024
_VMEM_LIMIT_BYTES = 48 * 1024 * 1024

# Below this many elements a standalone Pallas launch costs more than it saves
# (dedicated HBM read+write + launch overhead vs. letting XLA fuse the op).
_MIN_PALLAS_ELEMENTS = 256 * 1024


def _sublane_multiple(dtype):
    """Rows per packed vreg tile: 8 for f32, 16 for bf16, 32 for int8/fp8."""
    itemsize = jnp.dtype(dtype).itemsize
    return max(8, 32 // max(itemsize, 1))


def _sigfreud_kernel(x_ref, o_ref, *, log_beta):
    # Elementwise hot path.  sigmoid via tanh-form: one EUP tanh instead of
    # exp + divide; then one EUP exp for the power.  On v5e/v6e this is firmly
    # HBM-bound so the EUP work is free filler.
    # TODO(synk): if a v7x bundle dump shows the EUP slot binding (2
    # transcendentals/elem vs 3.2 TB/s HBM), replace tanh with a short VPU
    # polynomial so only the exp remains.
    x = x_ref[...].astype(jnp.float32)
    s = 0.5 * (1.0 + jnp.tanh(0.5 * x))        # == sigmoid(x)
    # beta ** s - 1 == exp(s * ln(beta)) - 1.  (expm1 would be more accurate
    # for beta ~ 1; exp kept for guaranteed Mosaic lowering, error << 1e-5.)
    y = jnp.exp(s * log_beta) - 1.0
    o_ref[...] = y.astype(o_ref.dtype)


def _choose_layout(n, sub):
    """Pick (rows, lane, pad) for a lane-dense 2D slab."""
    widest_lane_dense = None
    for lane in _LANE_CANDIDATES:
        if n % lane != 0:
            continue
        rows = n // lane
        if widest_lane_dense is None:
            widest_lane_dense = (rows, lane)
        if rows >= sub and rows % sub == 0:
            return rows, lane, 0              # fully packed vregs, no padding
    if widest_lane_dense is not None:
        # Lane-dense with a ragged sublane count; cdiv tiling with an
        # (sub,128)-aligned block handles it.  Do NOT narrow to lane=128.
        return widest_lane_dense[0], widest_lane_dense[1], 0
    # Truly ragged n: pad up to a multiple of (sub, 128).  Rare path.
    lane = 128
    pad = (-n) % (sub * lane)
    rows = (n + pad) // lane
    return rows, lane, pad


def _block_rows_and_grid(rows, lane, itemsize, sub):
    """Pick a (sub,128)-aligned row block and cdiv grid length."""
    if rows <= sub:
        return rows, 1                        # tiny slab: full-extent block
    max_block_rows = max(sub, (_MAX_BLOCK_BYTES // (lane * itemsize)) // sub * sub)
    total_bytes = rows * lane * itemsize
    # >= 2 steps so both v7x TensorCores get work; >= 4 steps above ~2 MiB so
    # the pipeline has depth to overlap DMA-in / compute / DMA-out.
    min_steps = 4 if total_bytes >= 2 * 1024 * 1024 else 2
    block_rows = min(max_block_rows, pl.cdiv(rows, min_steps))
    block_rows = max(sub, ((block_rows + sub - 1) // sub) * sub)
    block_rows = min(block_rows, max_block_rows)
    num_blocks = pl.cdiv(rows, block_rows)    # ragged last block handled by Pallas
    return block_rows, num_blocks


def _sigfreud_jnp(x, beta):
    """Pure-jnp path: exact torch semantics (incl. beta <= 0), XLA-fusable."""
    xf = x.astype(jnp.float32)
    return (jnp.float32(beta) ** jax.nn.sigmoid(xf) - 1.0).astype(x.dtype)


def sigfreud(x, beta=1.0, *, force_pallas=False):
    """Apply Sigfreud activation: beta ** sigmoid(x) - 1 (elementwise)."""
    beta = float(beta)
    orig_shape = x.shape
    orig_dtype = x.dtype
    n = x.size

    if beta == 1.0:
        # 1 ** sigmoid(x) - 1 == 0 exactly; skip HBM traffic and launch.
        return jnp.zeros(orig_shape, dtype=orig_dtype)
    if n == 0 or beta <= 0.0:
        # Degenerate bases (0**s, negative**fractional): torch-exact jnp path.
        return _sigfreud_jnp(x, beta)
    if n < _MIN_PALLAS_ELEMENTS and not force_pallas:
        # Tiny tensors: fused jnp expression beats a standalone Pallas launch.
        return _sigfreud_jnp(x, beta)

    log_beta = math.log(beta)                 # host-side constant, no device sync

    sub = _sublane_multiple(orig_dtype)
    itemsize = jnp.dtype(orig_dtype).itemsize
    rows, lane, pad = _choose_layout(n, sub)

    flat = x.reshape(-1)
    if pad:
        flat = jnp.pad(flat, (0, pad))
    x2d = flat.reshape(rows, lane)

    block_rows, num_blocks = _block_rows_and_grid(rows, lane, itemsize, sub)

    kernel = functools.partial(_sigfreud_kernel, log_beta=log_beta)

    out2d = pl.pallas_call(
        kernel,
        out_shape=jax.ShapeDtypeStruct((rows, lane), orig_dtype),
        grid_spec=pltpu.PrefetchScalarGridSpec(
            num_scalar_prefetch=0,
            grid=(num_blocks,),
            in_specs=[pl.BlockSpec((block_rows, lane), lambda i: (i, 0))],
            out_specs=pl.BlockSpec((block_rows, lane), lambda i: (i, 0)),
        ),
        compiler_params=pltpu.CompilerParams(
            dimension_semantics=("parallel",),
            vmem_limit_bytes=_VMEM_LIMIT_BYTES,
        ),
        cost_estimate=pl.CostEstimate(
            flops=5 * n,
            transcendentals=2 * n,
            bytes_accessed=2 * n * itemsize,
        ),
    )(x2d)

    out_flat = out2d.reshape(-1)
    if pad:
        out_flat = out_flat[:n]
    return out_flat.reshape(orig_shape)


def sigfreud_ref(x, beta=1.0):
    """Pure-JAX reference matching the PyTorch forward exactly."""
    return float(beta) ** jax.nn.sigmoid(x.astype(jnp.float32)) - 1.0


if __name__ == "__main__":
    key = jax.random.PRNGKey(0)
    # NCHW activation shape implied by the module's typical usage.
    x = jax.random.normal(key, (2, 4, 16, 16), dtype=jnp.float32)
    beta = 2.0  # module default is 1.0 (all-zeros output); use 2.0 to exercise math

    # Force the Pallas path at this small size so the kernel is exercised
    # (the default policy routes <256K-element tensors to the fused-jnp path).
    y = jax.block_until_ready(sigfreud(x, beta=beta, force_pallas=True))
    y_ref = sigfreud_ref(x, beta=beta)
    assert y.shape == x.shape and y.dtype == x.dtype
    assert jnp.allclose(y, y_ref, atol=1e-5, rtol=1e-5), "mismatch vs reference"

    # Multi-block cdiv tiling with a ragged last block (72 rows, 40-row blocks).
    x2 = jax.random.normal(jax.random.PRNGKey(1), (4, 4, 96, 96), dtype=jnp.float32)
    y2 = jax.block_until_ready(sigfreud(x2, beta=3.0, force_pallas=True))
    assert jnp.allclose(y2, sigfreud_ref(x2, beta=3.0), atol=1e-5, rtol=1e-5)

    # Default small-tensor policy (fused jnp) and beta == 1 short-circuit.
    y_small = jax.block_until_ready(sigfreud(x, beta=beta))
    assert jnp.allclose(y_small, y_ref, atol=1e-5, rtol=1e-5)
    y1 = jax.block_until_ready(sigfreud(x, beta=1.0))
    assert jnp.allclose(y1, jnp.zeros_like(x)), "beta=1 path should be all zeros"

    print("KERNEL_OK")
</pallas_src>

<mosaic_0001>
module attributes {stable_mosaic.version = 11 : i64} {
  func.func @_sigfreud_kernel(%arg0: i32, %arg1: memref<8x256xf32, #tpu.memory_space<vmem>>, %arg2: memref<8x256xf32, #tpu.memory_space<vmem>>) attributes {dimension_semantics = [#tpu.dimension_semantics<parallel>], iteration_bounds = array<i64: 1>, scalar_prefetch = 0 : i64, scratch_operands = 0 : i64, tpu.core_type = #tpu.core_type<tc>, window_params = [{transform_indices = @transform_0, window_bounds = array<i64: 8, 256>}, {transform_indices = @transform_1, window_bounds = array<i64: 8, 256>}]} {
    %c0 = arith.constant 0 : index
    %c0_0 = arith.constant 0 : index
    %0 = vector.load %arg1[%c0, %c0_0] : memref<8x256xf32, #tpu.memory_space<vmem>>, vector<8x256xf32>
    %cst = arith.constant 5.000000e-01 : f32
    %1 = vector.broadcast %cst : f32 to vector<8x256xf32>
    %2 = arith.mulf %1, %0 : vector<8x256xf32>
    %3 = math.tanh %2 : vector<8x256xf32>
    %cst_1 = arith.constant 1.000000e+00 : f32
    %4 = vector.broadcast %cst_1 : f32 to vector<8x256xf32>
    %5 = arith.addf %4, %3 : vector<8x256xf32>
    %cst_2 = arith.constant 5.000000e-01 : f32
    %6 = vector.broadcast %cst_2 : f32 to vector<8x256xf32>
    %7 = arith.mulf %6, %5 : vector<8x256xf32>
    %cst_3 = arith.constant 0.693147182 : f32
    %8 = vector.broadcast %cst_3 : f32 to vector<8x256xf32>
    %9 = arith.mulf %7, %8 : vector<8x256xf32>
    %10 = math.exp %9 : vector<8x256xf32>
    %cst_4 = arith.constant 1.000000e+00 : f32
    %11 = vector.broadcast %cst_4 : f32 to vector<8x256xf32>
    %12 = arith.subf %10, %11 : vector<8x256xf32>
    %c0_5 = arith.constant 0 : index
    %c0_6 = arith.constant 0 : index
    %13 = vector.load %arg2[%c0_5, %c0_6] : memref<8x256xf32, #tpu.memory_space<vmem>>, vector<8x256xf32>
    tpu.vector_store %arg2[%c0_5, %c0_6], %12 {strides = array<i32>} : memref<8x256xf32, #tpu.memory_space<vmem>>, vector<8x256xf32>,
    return
  }
  func.func @transform_0(%arg0: i32) -> (i32, i32) {
    %c0_i32 = arith.constant 0 : i32
    %c0_i32_0 = arith.constant 0 : i32
    return %arg0, %c0_i32 : i32, i32
  }
  func.func @transform_1(%arg0: i32) -> (i32, i32) {
    %c0_i32 = arith.constant 0 : i32
    %c0_i32_0 = arith.constant 0 : i32
    return %arg0, %c0_i32 : i32, i32
  }
}

</mosaic_0001>

<llo_original>
// kernel: tpu_custom_call.1
$region0: #{tpu_custom_call.1}
  #allocation0 [shape = 'u32[]', space=smem, size = 0x4, offset = 0x4, fixed_abs, tag = 'smem constant byte address 0x4 - core index']
  #allocation1 [shape = 'u32[72,128]{1,0:T(1,128)}', space=vmem, size = 0x9000, scoped, tag = 'internal scratch']
  %s0 = inlined_call_operand.hbm [shape: f32[8,256], index: 0, kind: input, shape index: {}]
  %s1 = inlined_call_operand.hbm [shape: f32[8,256], index: 1, kind: output, shape index: {}]
  %s2 = sld [smem:[#allocation0]]
  $region18: #{tpu_custom_call.1} parent=0
    _
  %s4 = ssub.s32 1, %s2
  %s5 = scalar_select 0, %s4, %s2
  $region1: #{tpu_custom_call.1} parent=0
    #allocation2 [shape = 'u8[8192]{0}', space=vmem, size = 0x2000, scoped, tag = 'input window, operand 0, single buffered']
    #allocation3 [shape = 's32[1]{0}', space=sflag, size = 0x4, scoped, tag = 'scoped memory for tpu_custom_call.1']
    #allocation4 [shape = 's32[1]{0}', space=sflag, size = 0x4, scoped, tag = 'scoped memory for tpu_custom_call.1']
    #allocation5 [shape = 'u8[8192]{0}', space=vmem, size = 0x2000, scoped, tag = 'output window, operand 0, single buffered']
    %6 = vsyncpa [#allocation3], 0
    %7 = vsyncpa [#allocation4], 0
    // Predicated region
    $region2: #{tpu_custom_call.1} parent=1 // pred_check
      _
    $region3: #{tpu_custom_call.1} parent=1 // pred_check_branch
      %9 = sbr.rel (0) target = $region5
    $region4: #{tpu_custom_call.1} parent=1 // pred_region
      %11 = vsyncadd [#allocation3], 0
      %s13 = sshll.u32 %s0, 4
      %s14 = int_to_ptr.hbm [resolvable:$true] %s13
      %s15 = sshll.u32 [#allocation2], 4
      %s16 = int_to_ptr.vmem [resolvable:$true] %s15
      %18 = dma.hbm_to_vmem [thread:$0]  %s14, 256, %s16, [#allocation3]
    $region5: #{tpu_custom_call.1} parent=1 // pred_fallthru
      _
    // Predicated region
    $region6: #{tpu_custom_call.1} parent=1 // pred_check
      _
    $region7: #{tpu_custom_call.1} parent=1 // pred_check_branch
      %20 = sbr.rel (0) target = $region9
    $region8: #{tpu_custom_call.1} parent=1 // pred_region
      %22 = dma.done [#allocation3], 256
    $region9: #{tpu_custom_call.1} parent=1 // pred_fallthru
      _
    %v23 = vld [vmem:[#allocation2] sm:$0xff]
    %v24 = vld [vmem:[#allocation2 + $0x8] sm:$0xff]
    %v25 = vmul.f32 %v23, 0.5
    %v26 = vmul.f32 %v24, 0.5
    %v27 = vtanh.pop %v25
    %v28 = vtanh.pop %v26
    %v29 = vadd.f32 %v27, 1.0
    %v30 = vadd.f32 %v28, 1.0
    %v31 = vmul.f32 %v29, 0.5
    %v32 = vmul.f32 %v30, 0.5
    %v33 = vmul.f32 %v31, 0.6931472
    %v34 = vmul.f32 %v32, 0.6931472
    %v35 = vmul.f32 %v33, 1.442695
    %v36 = vpow.pop %v35
    %v37 = vmul.f32 %v34, 1.442695
    %v38 = vpow.pop %v37
    %v39 = vsub.f32 %v36, 1.0
    %v40 = vsub.f32 %v38, 1.0
    %41 = vst [vmem:[#allocation5] sm:$0xff] %v39
    %42 = vst [vmem:[#allocation5 + $0x8] sm:$0xff] %v40
    // Predicated region
    $region10: #{tpu_custom_call.1} parent=1 // pred_check
      _
    $region11: #{tpu_custom_call.1} parent=1 // pred_check_branch
      %44 = sbr.rel (0) target = $region13
    $region12: #{tpu_custom_call.1} parent=1 // pred_region
      %46 = vsyncadd [#allocation4], 0
      %s48 = sshll.u32 [#allocation5], 4
      %s49 = int_to_ptr.vmem [resolvable:$true] %s48
      %s50 = sshll.u32 %s1, 4
      %s51 = int_to_ptr.hbm [resolvable:$true] %s50
      %53 = dma.vmem_to_hbm [thread:$0]  %s49, 256, %s51, [#allocation4]
    $region13: #{tpu_custom_call.1} parent=1 // pred_fallthru
      _
    // Predicated region
    $region14: #{tpu_custom_call.1} parent=1 // pred_check
      _
    $region15: #{tpu_custom_call.1} parent=1 // pred_check_branch
      %55 = sbr.rel (0) target = $region17
    $region16: #{tpu_custom_call.1} parent=1 // pred_region
      %57 = dma.done [#allocation4], 256
    $region17: #{tpu_custom_call.1} parent=1 // pred_fallthru
      _
    %58 = vsyncpa [#allocation3], 1
    %59 = vsyncpa [#allocation4], 1

</llo_original>
